<compile_context>
chip_gen: v7x
topology: tpu7x:2x2x1
jax: 0.10.0
libtpu: 0.0.40
codegen_flags: <defaults>
</compile_context>

<pallas_src>
import functools

import jax
import jax.numpy as jnp
from jax import lax
from jax.experimental import pallas as pl
from jax.experimental.pallas import tpu as pltpu


def _round_up(a, b):
    return (a + b - 1) // b * b


def _pick_tile(dim, candidates):
    for c in candidates:
        if dim % c == 0:
            return c
    return candidates[-1]


def autoencoder_kernel(x_ref, weT_ref, be_ref, wdT_ref,
                       enc_ref, dec_ref, cnt_ref, acc_ref,
                       *, batch, tb):
    i = pl.program_id(0)          # batch tile
    j = pl.program_id(1)          # hidden tile (decoder contraction axis)
    nj = pl.num_programs(1)

    # ---- encoder: relu(x @ W_enc^T + b) for this (batch, hidden) tile ----
    pre = jnp.dot(x_ref[...], weT_ref[...],
                  preferred_element_type=jnp.float32) + be_ref[...]
    enc = jnp.maximum(pre, 0.0)                               # (TB, TH) f32
    enc_ref[...] = enc.astype(enc_ref.dtype)

    # ---- per-tile nonzero count (mask padded batch rows) ----
    row = lax.broadcasted_iota(jnp.int32, enc.shape, 0) + i * tb
    # per-tile float sum is exact (tile elems << 2^24); accumulate across tiles in int32
    nz = jnp.sum(((enc > 0.0) & (row < batch)).astype(jnp.float32)).astype(jnp.int32)

    @pl.when(j == 0)
    def _init():
        acc_ref[...] = jnp.zeros_like(acc_ref)
        cnt_ref[0, 0] = jnp.int32(0)

    cnt_ref[0, 0] += nz

    # ---- decoder: accumulate enc_tile @ W_dec_norm^T over hidden tiles ----
    acc_ref[...] += jnp.dot(enc.astype(wdT_ref.dtype), wdT_ref[...],
                            preferred_element_type=jnp.float32)

    @pl.when(j == nj - 1)
    def _finalize():
        dec_ref[...] = acc_ref[...].astype(dec_ref.dtype)


def autoencoder_forward(x, w_enc, b_enc, w_dec, *, use_bf16=False):
    """x: (B, D); w_enc: (H, D) torch layout; b_enc: (H,); w_dec: (D, H) torch layout."""
    B, D = x.shape
    H = w_enc.shape[0]

    # Hoisted decoder-weight column normalization (torch's norm_()) -- rsqrt multiply,
    # computed once per call instead of per grid step.
    # TODO(synk): torch mutates decoder.weight in place; here the normalized weight is
    # used functionally (same forward outputs, no parameter mutation).
    inv_norm = lax.rsqrt(jnp.sum(w_dec * w_dec, axis=0, keepdims=True))   # (1, H)
    wdT = (w_dec * inv_norm).T                                            # (H, D)
    weT = w_enc.T                                                         # (D, H)
    be = b_enc.reshape(1, H).astype(jnp.float32)

    # ---- lane-dense padding + tile selection ----
    Dp = _round_up(D, 128)
    Hp = _round_up(H, 128)
    Bp = _round_up(B, 8)
    TB = _pick_tile(Bp, (256, 128, 64, 32, 16, 8))
    TH = _pick_tile(Hp, (512, 256, 128))
    nb, nh = Bp // TB, Hp // TH

    cdt = jnp.bfloat16 if use_bf16 else jnp.float32
    x_p = jnp.pad(x.astype(cdt), ((0, Bp - B), (0, Dp - D)))
    weT_p = jnp.pad(weT.astype(cdt), ((0, Dp - D), (0, Hp - H)))
    be_p = jnp.pad(be, ((0, 0), (0, Hp - H)))
    wdT_p = jnp.pad(wdT.astype(cdt), ((0, Hp - H), (0, Dp - D)))

    kern = functools.partial(autoencoder_kernel, batch=B, tb=TB)

    itemsize = 2 if use_bf16 else 4
    cost = pl.CostEstimate(
        flops=4 * Bp * Dp * Hp,
        transcendentals=0,
        bytes_accessed=(Bp * Dp + 2 * Dp * Hp + Hp) * itemsize
                       + (Bp * Hp + Bp * Dp) * 4,
    )

    enc_p, dec_p, cnt_p = pl.pallas_call(
        kern,
        out_shape=(
            jax.ShapeDtypeStruct((Bp, Hp), jnp.float32),   # encoded (padded)
            jax.ShapeDtypeStruct((Bp, Dp), jnp.float32),   # decoded (padded)
            jax.ShapeDtypeStruct((nb, 1), jnp.int32),      # per-batch-tile nonzero count
        ),
        grid_spec=pltpu.PrefetchScalarGridSpec(
            num_scalar_prefetch=0,
            grid=(nb, nh),
            in_specs=[
                pl.BlockSpec((TB, Dp), lambda i, j: (i, 0)),   # x tile
                pl.BlockSpec((Dp, TH), lambda i, j: (0, j)),   # W_enc^T tile
                pl.BlockSpec((1, TH), lambda i, j: (0, j)),    # bias tile
                pl.BlockSpec((TH, Dp), lambda i, j: (j, 0)),   # W_dec_norm^T tile
            ],
            out_specs=(
                pl.BlockSpec((TB, TH), lambda i, j: (i, j)),   # encoded tile
                pl.BlockSpec((TB, Dp), lambda i, j: (i, 0)),   # decoded (revisited over j)
                pl.BlockSpec((1, 1), lambda i, j: (i, 0),
                             memory_space=pltpu.MemorySpace.SMEM),
            ),
            scratch_shapes=[pltpu.VMEM((TB, Dp), jnp.float32)],
        ),
        compiler_params=pltpu.CompilerParams(
            dimension_semantics=("parallel", "arbitrary"),
            vmem_limit_bytes=48 * 1024 * 1024,
        ),
        cost_estimate=cost,
    )(x_p, weT_p, be_p, wdT_p)

    encoded = enc_p[:B, :H]
    decoded = dec_p[:B, :D]
    num_coeffs = jnp.sum(cnt_p)
    return encoded, decoded, num_coeffs


# ------------------------- deterministic parameter init -------------------------

def xavier_uniform(key, shape):
    fan_out, fan_in = shape              # torch Linear weight is (out, in)
    bound = jnp.sqrt(6.0 / (fan_in + fan_out))
    return jax.random.uniform(key, shape, jnp.float32, -bound, bound)


def orthogonal_init(key, shape):
    rows, cols = shape
    a = jax.random.normal(key, (max(rows, cols), min(rows, cols)), jnp.float32)
    q, r = jnp.linalg.qr(a)
    q = q * jnp.sign(jnp.diagonal(r))[None, :]
    if rows < cols:
        q = q.T
    return q[:rows, :cols]


def reference_forward(x, w_enc, b_enc, w_dec):
    enc = jnp.maximum(x @ w_enc.T + b_enc[None, :], 0.0)
    cnt = jnp.sum(jnp.count_nonzero(enc, axis=1))
    wd_n = w_dec / jnp.linalg.norm(w_dec, ord=2, axis=0, keepdims=True)
    dec = enc @ wd_n.T
    return enc, dec, cnt


if __name__ == "__main__":
    batch, input_dim, hidden_dim = 8, 16, 32

    key = jax.random.PRNGKey(0)
    k_x, k_we, k_be, k_wd = jax.random.split(key, 4)

    x = jax.random.normal(k_x, (batch, input_dim), jnp.float32)
    w_enc = xavier_uniform(k_we, (hidden_dim, input_dim))                 # (H, D)
    b_enc = jax.random.uniform(k_be, (hidden_dim,), jnp.float32,
                               -1.0 / jnp.sqrt(input_dim),
                               1.0 / jnp.sqrt(input_dim))                 # (H,)
    w_dec = orthogonal_init(k_wd, (input_dim, hidden_dim))                # (D, H)

    enc, dec, cnt = autoencoder_forward(x, w_enc, b_enc, w_dec)
    jax.block_until_ready((enc, dec, cnt))

    # correctness check against pure-JAX reference
    enc_r, dec_r, cnt_r = reference_forward(x, w_enc, b_enc, w_dec)
    assert enc.shape == (batch, hidden_dim)
    assert dec.shape == (batch, input_dim)
    assert jnp.allclose(enc, enc_r, atol=1e-4, rtol=1e-4)
    assert jnp.allclose(dec, dec_r, atol=1e-4, rtol=1e-4)
    assert int(cnt) == int(cnt_r)

    print("KERNEL_OK")
</pallas_src>

<mosaic_0001>
module attributes {stable_mosaic.version = 11 : i64} {
  func.func @autoencoder_kernel(%arg0: i32, %arg1: i32, %arg2: memref<8x128xf32, #tpu.memory_space<vmem>>, %arg3: memref<128x128xf32, #tpu.memory_space<vmem>>, %arg4: memref<1x128xf32, #tpu.memory_space<vmem>>, %arg5: memref<128x128xf32, #tpu.memory_space<vmem>>, %arg6: memref<8x128xf32, #tpu.memory_space<vmem>>, %arg7: memref<8x128xf32, #tpu.memory_space<vmem>>, %arg8: memref<1x1xi32, #tpu.memory_space<smem>>, %arg9: memref<8x128xf32, #tpu.memory_space<vmem>>) attributes {dimension_semantics = [#tpu.dimension_semantics<parallel>, #tpu.dimension_semantics<arbitrary>], iteration_bounds = array<i64: 1, 1>, scalar_prefetch = 0 : i64, scratch_operands = 1 : i64, tpu.core_type = #tpu.core_type<tc>, window_params = [{transform_indices = @transform_0, window_bounds = array<i64: 8, 128>}, {transform_indices = @transform_1, window_bounds = array<i64: 128, 128>}, {transform_indices = @transform_2, window_bounds = array<i64: 1, 128>}, {transform_indices = @transform_3, window_bounds = array<i64: 128, 128>}, {transform_indices = @transform_4, window_bounds = array<i64: 8, 128>}, {transform_indices = @transform_5, window_bounds = array<i64: 8, 128>}, {transform_indices = @transform_6, window_bounds = array<i64: 1, 1>}]} {
    %c0 = arith.constant 0 : index
    %c0_0 = arith.constant 0 : index
    %0 = vector.load %arg2[%c0, %c0_0] : memref<8x128xf32, #tpu.memory_space<vmem>>, vector<8x128xf32>
    %c0_1 = arith.constant 0 : index
    %c0_2 = arith.constant 0 : index
    %1 = vector.load %arg3[%c0_1, %c0_2] : memref<128x128xf32, #tpu.memory_space<vmem>>, vector<128x128xf32>
    %cst = arith.constant dense<0.000000e+00> : vector<8x128xf32>
    %2 = tpu.matmul %0, %1, %cst {dimension_numbers = #tpu.dot_dimension_numbers<[1], [0], [0], [1], [0, 0, 1, 1], [], []>} : vector<8x128xf32>, vector<128x128xf32>, vector<8x128xf32> -> vector<8x128xf32>
    %c0_3 = arith.constant 0 : index
    %c0_4 = arith.constant 0 : index
    %3 = vector.load %arg4[%c0_3, %c0_4] : memref<1x128xf32, #tpu.memory_space<vmem>>, vector<1x128xf32>
    %4 = vector.broadcast %3 : vector<1x128xf32> to vector<8x128xf32>
    %5 = arith.addf %2, %4 : vector<8x128xf32>
    %cst_5 = arith.constant 0.000000e+00 : f32
    %6 = vector.broadcast %cst_5 : f32 to vector<8x128xf32>
    %7 = arith.maximumf %5, %6 : vector<8x128xf32>
    %c0_6 = arith.constant 0 : index
    %c0_7 = arith.constant 0 : index
    %8 = vector.load %arg6[%c0_6, %c0_7] : memref<8x128xf32, #tpu.memory_space<vmem>>, vector<8x128xf32>
    tpu.vector_store %arg6[%c0_6, %c0_7], %7 {strides = array<i32>} : memref<8x128xf32, #tpu.memory_space<vmem>>, vector<8x128xf32>,
    %9 = tpu.iota {dimensions = array<i32: 0>} : vector<8x128xi32>
    %c8_i32 = arith.constant 8 : i32
    %10 = arith.muli %arg0, %c8_i32 : i32
    %11 = vector.broadcast %10 : i32 to vector<8x128xi32>
    %12 = arith.addi %9, %11 : vector<8x128xi32>
    %cst_8 = arith.constant 0.000000e+00 : f32
    %13 = vector.broadcast %cst_8 : f32 to vector<8x128xf32>
    %14 = arith.cmpf ogt, %7, %13 : vector<8x128xf32>
    %c8_i32_9 = arith.constant 8 : i32
    %15 = vector.broadcast %c8_i32_9 : i32 to vector<8x128xi32>
    %16 = arith.cmpi slt, %12, %15 : vector<8x128xi32>
    %17 = arith.andi %14, %16 : vector<8x128xi1>
    %18 = arith.extui %17 : vector<8x128xi1> to vector<8x128xi32>
    %19 = arith.sitofp %18 : vector<8x128xi32> to vector<8x128xf32>
    %20 = vector.shape_cast %19 : vector<8x128xf32> to vector<1x8x128xf32>
    %cst_10 = arith.constant dense<0.000000e+00> : vector<1xf32>
    %21 = vector.multi_reduction <add>, %20, %cst_10 [1, 2] : vector<1x8x128xf32> to vector<1xf32>
    %22 = vector.shape_cast %21 : vector<1xf32> to vector<1x1x1xf32>
    %23 = vector.extract %22[0, 0, 0] : f32 from vector<1x1x1xf32>
    %24 = arith.fptosi %23 : f32 to i32
    %c0_i32 = arith.constant 0 : i32
    %25 = arith.cmpi eq, %arg1, %c0_i32 : i32
    %26 = arith.extui %25 : i1 to i32
    %c0_i32_11 = arith.constant 0 : i32
    %27 = arith.cmpi ne, %26, %c0_i32_11 : i32
    scf.if %27 {
      %cst_25 = arith.constant 0.000000e+00 : f32
      %39 = vector.broadcast %cst_25 : f32 to vector<8x128xf32>
      %c0_26 = arith.constant 0 : index
      %c0_27 = arith.constant 0 : index
      %40 = vector.load %arg9[%c0_26, %c0_27] : memref<8x128xf32, #tpu.memory_space<vmem>>, vector<8x128xf32>
      tpu.vector_store %arg9[%c0_26, %c0_27], %39 {strides = array<i32>} : memref<8x128xf32, #tpu.memory_space<vmem>>, vector<8x128xf32>,
      %c0_i32_28 = arith.constant 0 : i32
      %c0_29 = arith.constant 0 : index
      %c0_30 = arith.constant 0 : index
      %41 = memref.load %arg8[%c0_29, %c0_30] : memref<1x1xi32, #tpu.memory_space<smem>>
      memref.store %c0_i32_28, %arg8[%c0_29, %c0_30] : memref<1x1xi32, #tpu.memory_space<smem>>
    } else {
    }
    %c0_12 = arith.constant 0 : index
    %c0_13 = arith.constant 0 : index
    %28 = memref.load %arg8[%c0_12, %c0_13] : memref<1x1xi32, #tpu.memory_space<smem>>
    %29 = arith.addi %28, %24 : i32
    %c0_14 = arith.constant 0 : index
    %c0_15 = arith.constant 0 : index
    %30 = memref.load %arg8[%c0_14, %c0_15] : memref<1x1xi32, #tpu.memory_space<smem>>
    memref.store %29, %arg8[%c0_14, %c0_15] : memref<1x1xi32, #tpu.memory_space<smem>>
    %c0_16 = arith.constant 0 : index
    %c0_17 = arith.constant 0 : index
    %31 = vector.load %arg9[%c0_16, %c0_17] : memref<8x128xf32, #tpu.memory_space<vmem>>, vector<8x128xf32>
    %c0_18 = arith.constant 0 : index
    %c0_19 = arith.constant 0 : index
    %32 = vector.load %arg5[%c0_18, %c0_19] : memref<128x128xf32, #tpu.memory_space<vmem>>, vector<128x128xf32>
    %cst_20 = arith.constant dense<0.000000e+00> : vector<8x128xf32>
    %33 = tpu.matmul %7, %32, %cst_20 {dimension_numbers = #tpu.dot_dimension_numbers<[1], [0], [0], [1], [0, 0, 1, 1], [], []>} : vector<8x128xf32>, vector<128x128xf32>, vector<8x128xf32> -> vector<8x128xf32>
    %34 = arith.addf %31, %33 : vector<8x128xf32>
    %c0_21 = arith.constant 0 : index
    %c0_22 = arith.constant 0 : index
    %35 = vector.load %arg9[%c0_21, %c0_22] : memref<8x128xf32, #tpu.memory_space<vmem>>, vector<8x128xf32>
    tpu.vector_store %arg9[%c0_21, %c0_22], %34 {strides = array<i32>} : memref<8x128xf32, #tpu.memory_space<vmem>>, vector<8x128xf32>,
    %c0_i32_23 = arith.constant 0 : i32
    %36 = arith.cmpi eq, %arg1, %c0_i32_23 : i32
    %37 = arith.extui %36 : i1 to i32
    %c0_i32_24 = arith.constant 0 : i32
    %38 = arith.cmpi ne, %37, %c0_i32_24 : i32
    scf.if %38 {
      %c0_25 = arith.constant 0 : index
      %c0_26 = arith.constant 0 : index
      %39 = vector.load %arg9[%c0_25, %c0_26] : memref<8x128xf32, #tpu.memory_space<vmem>>, vector<8x128xf32>
      %c0_27 = arith.constant 0 : index
      %c0_28 = arith.constant 0 : index
      %40 = vector.load %arg7[%c0_27, %c0_28] : memref<8x128xf32, #tpu.memory_space<vmem>>, vector<8x128xf32>
      tpu.vector_store %arg7[%c0_27, %c0_28], %39 {strides = array<i32>} : memref<8x128xf32, #tpu.memory_space<vmem>>, vector<8x128xf32>,
    } else {
    }
    return
  }
  func.func @transform_0(%arg0: i32, %arg1: i32) -> (i32, i32) {
    %c0_i32 = arith.constant 0 : i32
    %c0_i32_0 = arith.constant 0 : i32
    return %arg0, %c0_i32 : i32, i32
  }
  func.func @transform_1(%arg0: i32, %arg1: i32) -> (i32, i32) {
    %c0_i32 = arith.constant 0 : i32
    %c0_i32_0 = arith.constant 0 : i32
    return %c0_i32, %arg1 : i32, i32
  }
  func.func @transform_2(%arg0: i32, %arg1: i32) -> (i32, i32) {
    %c0_i32 = arith.constant 0 : i32
    %c0_i32_0 = arith.constant 0 : i32
    return %c0_i32, %arg1 : i32, i32
  }
  func.func @transform_3(%arg0: i32, %arg1: i32) -> (i32, i32) {
    %c0_i32 = arith.constant 0 : i32
    %c0_i32_0 = arith.constant 0 : i32
    return %arg1, %c0_i32 : i32, i32
  }
  func.func @transform_4(%arg0: i32, %arg1: i32) -> (i32, i32) {
    %c0_i32 = arith.constant 0 : i32
    return %arg0, %arg1 : i32, i32
  }
  func.func @transform_5(%arg0: i32, %arg1: i32) -> (i32, i32) {
    %c0_i32 = arith.constant 0 : i32
    %c0_i32_0 = arith.constant 0 : i32
    return %arg0, %c0_i32 : i32, i32
  }
  func.func @transform_6(%arg0: i32, %arg1: i32) -> (i32, i32) {
    %c0_i32 = arith.constant 0 : i32
    %c0_i32_0 = arith.constant 0 : i32
    return %arg0, %c0_i32 : i32, i32
  }
}

</mosaic_0001>

<llo_original>
// kernel: tpu_custom_call.1
$region0: #{tpu_custom_call.1}
  #allocation0 [shape = 'u32[]', space=smem, size = 0x4, offset = 0x4, fixed_abs, tag = 'smem constant byte address 0x4 - core index']
  #allocation1 [shape = 'u32[144,128]{1,0:T(1,128)}', space=vmem, size = 0x12000, scoped, tag = 'internal scratch']
  #allocation2 [shape = 'f32[8,128]{1,0:T(8,128)}', space=vmem, size = 0x1000, scoped, tag = 'scratch operand']
  %s0 = inlined_call_operand.hbm [shape: f32[8,128], index: 0, kind: input, shape index: {}]
  %s1 = inlined_call_operand.hbm [shape: f32[128,128], index: 1, kind: input, shape index: {}]
  %s2 = inlined_call_operand.vmem [shape: f32[1,128], index: 2, kind: input, shape index: {}]
  %s3 = inlined_call_operand.hbm [shape: f32[128,128], index: 3, kind: input, shape index: {}]
  %s4 = inlined_call_operand.hbm [shape: f32[8,128], index: 4, kind: output, shape index: {0}]
  %s5 = inlined_call_operand.hbm [shape: f32[8,128], index: 5, kind: output, shape index: {1}]
  %s6 = inlined_call_operand.hbm [shape: s32[1,1], index: 6, kind: output, shape index: {2}]
  %7 = xla_tuple %s4, %s5, %s6
  %s8 = sld [smem:[#allocation0]]
  $region62: #{tpu_custom_call.1} parent=0
    _
  %s10 = ssub.s32 1, %s8
  %s11 = scalar_select 0, %s10, %s8
  $region1: #{tpu_custom_call.1} parent=0
    #allocation3 [shape = 'u8[4096]{0}', space=vmem, size = 0x1000, scoped, tag = 'input window, operand 0, single buffered']
    #allocation4 [shape = 's32[1]{0}', space=sflag, size = 0x4, scoped, tag = 'scoped memory for tpu_custom_call.1']
    #allocation5 [shape = 's32[1]{0}', space=sflag, size = 0x4, scoped, tag = 'scoped memory for tpu_custom_call.1']
    #allocation6 [shape = 's32[1]{0}', space=sflag, size = 0x4, scoped, tag = 'scoped memory for tpu_custom_call.1']
    #allocation7 [shape = 'u8[65536]{0}', space=vmem, size = 0x10000, scoped, tag = 'input window, operand 1, single buffered']
    #allocation8 [shape = 's32[1]{0}', space=sflag, size = 0x4, scoped, tag = 'scoped memory for tpu_custom_call.1']
    #allocation9 [shape = 'u8[65536]{0}', space=vmem, size = 0x10000, scoped, tag = 'input window, operand 3, single buffered']
    #allocation10 [shape = 'u8[4096]{0}', space=vmem, size = 0x1000, scoped, tag = 'output window, operand 0, single buffered']
    #allocation11 [shape = 'u8[4096]{0}', space=vmem, size = 0x1000, scoped, tag = 'output window, operand 1, single buffered']
    #allocation12 [shape = 's32[1]{0}', space=sflag, size = 0x4, scoped, tag = 'scoped memory for tpu_custom_call.1']
    #allocation13 [shape = 'u8[512]{0}', space=smem, size = 0x200, scoped, tag = 'output window, operand 2, single buffered']
    %12 = vsyncpa [#allocation4], 0
    %13 = vsyncpa [#allocation8], 0
    %14 = vsyncpa [#allocation5], 0
    %15 = vsyncpa [#allocation12], 0
    %16 = vsyncpa [#allocation6], 0
    // Predicated region
    $region2: #{tpu_custom_call.1} parent=1 // pred_check
      _
    $region3: #{tpu_custom_call.1} parent=1 // pred_check_branch
      %18 = sbr.rel (0) target = $region5
    $region4: #{tpu_custom_call.1} parent=1 // pred_region
      %s20 = ssub.s32 128, 128
      %21 = vsyncadd [#allocation4], %s20
      %s23 = sshll.u32 [#allocation3], 4
      %s24 = int_to_ptr.vmem [resolvable:$true] %s23
      %26 = dma.hbm_to_vmem [thread:$0]  %s0, 128, %s24, [#allocation4]
    $region5: #{tpu_custom_call.1} parent=1 // pred_fallthru
      _
    // Predicated region
    $region6: #{tpu_custom_call.1} parent=1 // pred_check
      _
    $region7: #{tpu_custom_call.1} parent=1 // pred_check_branch
      %28 = sbr.rel (0) target = $region9
    $region8: #{tpu_custom_call.1} parent=1 // pred_region
      %s30 = ssub.s32 2048, 2048
      %31 = vsyncadd [#allocation8], %s30
      %s32 = sshll.u32 [#allocation7], 4
      %s33 = int_to_ptr.vmem [resolvable:$true] %s32
      %38 = dma.hbm_to_vmem [thread:$0]  %s1, 2048, %s33, [#allocation8], 128, 128, 8
    $region9: #{tpu_custom_call.1} parent=1 // pred_fallthru
      _
    // Predicated region
    $region10: #{tpu_custom_call.1} parent=1 // pred_check
      _
    $region11: #{tpu_custom_call.1} parent=1 // pred_check_branch
      %40 = sbr.rel (0) target = $region13
    $region12: #{tpu_custom_call.1} parent=1 // pred_region
      _
    $region13: #{tpu_custom_call.1} parent=1 // pred_fallthru
      _
    // Predicated region
    $region14: #{tpu_custom_call.1} parent=1 // pred_check
      _
    $region15: #{tpu_custom_call.1} parent=1 // pred_check_branch
      %42 = sbr.rel (0) target = $region17
    $region16: #{tpu_custom_call.1} parent=1 // pred_region
      %s44 = ssub.s32 2048, 2048
      %45 = vsyncadd [#allocation8], %s44
      %s46 = sshll.u32 [#allocation9], 4
      %s47 = int_to_ptr.vmem [resolvable:$true] %s46
      %52 = dma.hbm_to_vmem [thread:$0]  %s3, 2048, %s47, [#allocation8], 128, 128, 8
    $region17: #{tpu_custom_call.1} parent=1 // pred_fallthru
      _
    // Predicated region
    $region18: #{tpu_custom_call.1} parent=1 // pred_check
      _
    $region19: #{tpu_custom_call.1} parent=1 // pred_check_branch
      %54 = sbr.rel (0) target = $region21
    $region20: #{tpu_custom_call.1} parent=1 // pred_region
      %55 = dma.done [#allocation4], 128
    $region21: #{tpu_custom_call.1} parent=1 // pred_fallthru
      _
    // Predicated region
    $region22: #{tpu_custom_call.1} parent=1 // pred_check
      _
    $region23: #{tpu_custom_call.1} parent=1 // pred_check_branch
      %57 = sbr.rel (0) target = $region25
    $region24: #{tpu_custom_call.1} parent=1 // pred_region
      %58 = dma.done [#allocation8], 2048
    $region25: #{tpu_custom_call.1} parent=1 // pred_fallthru
      _
    // Predicated region
    $region26: #{tpu_custom_call.1} parent=1 // pred_check
      _
    $region27: #{tpu_custom_call.1} parent=1 // pred_check_branch
      %60 = sbr.rel (0) target = $region29
    $region28: #{tpu_custom_call.1} parent=1 // pred_region
      %61 = dma.done [#allocation8], 2048
    $region29: #{tpu_custom_call.1} parent=1 // pred_fallthru
      _
    %v62 = vld [vmem:[#allocation3] sm:$0xff]
    %v63 = vld [vmem:[#allocation7] sm:$0xff]
    %v64 = vld [vmem:[#allocation7 + $0x8] sm:$0xff]
    %v65 = vld [vmem:[#allocation7 + $0x10] sm:$0xff]
    %v66 = vld [vmem:[#allocation7 + $0x18] sm:$0xff]
    %v67 = vld [vmem:[#allocation7 + $0x20] sm:$0xff]
    %v68 = vld [vmem:[#allocation7 + $0x28] sm:$0xff]
    %v69 = vld [vmem:[#allocation7 + $0x30] sm:$0xff]
    %v70 = vld [vmem:[#allocation7 + $0x38] sm:$0xff]
    %v71 = vld [vmem:[#allocation7 + $0x40] sm:$0xff]
    %v72 = vld [vmem:[#allocation7 + $0x48] sm:$0xff]
    %v73 = vld [vmem:[#allocation7 + $0x50] sm:$0xff]
    %v74 = vld [vmem:[#allocation7 + $0x58] sm:$0xff]
    %v75 = vld [vmem:[#allocation7 + $0x60] sm:$0xff]
    %v76 = vld [vmem:[#allocation7 + $0x68] sm:$0xff]
    %v77 = vld [vmem:[#allocation7 + $0x70] sm:$0xff]
    %v78 = vld [vmem:[#allocation7 + $0x78] sm:$0xff]
    %v79 = vld [vmem:[%s2] sm:$0x1]
    %v81 = vlaneseq
    %v82 = vshrl.u32 %v81, 7
    %v83 = vsub.s32 0, %v82
    %v84 = vrot.slane %v79, %v83
    %86 = vmatprep.subr.mxu0 0.0
    %87 = vmatpush1.msra.mxu0 %v63
    %88 = vmatprep.subr.mxu0 0.0
    %89 = vmatpush1.msra.mxu0 %v64
    %90 = vmatprep.subr.mxu0 0.0
    %91 = vmatpush1.msra.mxu0 %v65
    %92 = vmatprep.subr.mxu0 0.0
    %93 = vmatpush1.msra.mxu0 %v66
    %94 = vmatprep.subr.mxu0 0.0
    %95 = vmatpush1.msra.mxu0 %v67
    %96 = vmatprep.subr.mxu0 0.0
    %97 = vmatpush1.msra.mxu0 %v68
    %98 = vmatprep.subr.mxu0 0.0
    %99 = vmatpush1.msra.mxu0 %v69
    %100 = vmatprep.subr.mxu0 0.0
    %101 = vmatpush1.msra.mxu0 %v70
    %102 = vmatprep.subr.mxu0 0.0
    %103 = vmatpush1.msra.mxu0 %v71
    %104 = vmatprep.subr.mxu0 0.0
    %105 = vmatpush1.msra.mxu0 %v72
    %106 = vmatprep.subr.mxu0 0.0
    %107 = vmatpush1.msra.mxu0 %v73
    %108 = vmatprep.subr.mxu0 0.0
    %109 = vmatpush1.msra.mxu0 %v74
    %110 = vmatprep.subr.mxu0 0.0
    %111 = vmatpush1.msra.mxu0 %v75
    %112 = vmatprep.subr.mxu0 0.0
    %113 = vmatpush1.msra.mxu0 %v76
    %114 = vmatprep.subr.mxu0 0.0
    %115 = vmatpush1.msra.mxu0 %v77
    %116 = vmatprep.subr.mxu0 0.0
    %117 = vmatpush1.msra.mxu0 %v78
    %118 = vmatprep.subr.mxu0 0.0
    %119 = vmatpush1.msra.mxu0 0.0
    %120 = vmatprep.subr.mxu0 0.0
    %121 = vmatpush1.msra.mxu0 0.0
    %122 = vmatprep.subr.mxu0 0.0
    %123 = vmatpush1.msra.mxu0 0.0
    %124 = vmatprep.subr.mxu0 0.0
    %125 = vmatpush1.msra.mxu0 0.0
    %126 = vmatprep.subr.mxu0 0.0
    %127 = vmatpush1.msra.mxu0 0.0
    %128 = vmatprep.subr.mxu0 0.0
    %129 = vmatpush1.msra.mxu0 0.0
    %130 = vmatprep.subr.mxu0 0.0
    %131 = vmatpush1.msra.mxu0 0.0
    %132 = vmatprep.subr.mxu0 0.0
    %133 = vmatpush1.msra.mxu0 0.0
    %134 = vmatprep.subr.mxu0 0.0
    %135 = vmatpush1.msra.mxu0 0.0
    %136 = vmatprep.subr.mxu0 0.0
    %137 = vmatpush1.msra.mxu0 0.0
    %138 = vmatprep.subr.mxu0 0.0
    %139 = vmatpush1.msra.mxu0 0.0
    %140 = vmatprep.subr.mxu0 0.0
    %141 = vmatpush1.msra.mxu0 0.0
    %142 = vmatprep.subr.mxu0 0.0
    %143 = vmatpush1.msra.mxu0 0.0
    %144 = vmatprep.subr.mxu0 0.0
    %145 = vmatpush1.msra.mxu0 0.0
    %146 = vmatprep.subr.mxu0 0.0
    %147 = vmatpush1.msra.mxu0 0.0
    %148 = vmatprep.subr.mxu0 0.0
    %149 = vmatpush1.msra.mxu0 0.0
    %150 = vmatprep.mubr.f32.mxu0 0.0
    %151 = vmatmul.mubr.f32.gmra.mrb[0].mxu0 %v62
    %v152 = vpop.f32.mrb[0].mxu0
    %v153 = vadd.f32 %v84, %v152
    %v154 = vpop.f32.mrb[0].mxu0
    %155 = vdwg.mxu0
    %v156 = vmax.f32 %v153, 0.0
    %157 = vst [vmem:[#allocation10] sm:$0xff] %v156
    %v158 = vlaneseq
    %v159 = vshrl.u32 %v158, 7
    %s160 = smul.u32 0, 8
    %v161 = vstv %s160
    %v162 = vadd.s32 %v159, %v161
    %vm163 = vcmp.gt.f32.partialorder %v156, 0.0
    %vm164 = vcmp.lt.s32.totalorder %v162, 8
    %vm165 = vmand %vm163, %vm164
    %v166 = vsel %vm165, 1, 0
    %v167 = vcvt.s32.f32 %v166
    %168 = vadd.xlane.f32.xlu0 %v167
    %v169 = vpop.xlane.xlu0 %168
    %v170 = vrot.slane %v169, 4
    %v171 = vadd.f32 %v169, %v170
    %v172 = vrot.slane %v171, 2
    %v173 = vadd.f32 %v171, %v172
    %v174 = vrot.slane %v173, 1
    %v175 = vadd.f32 %v173, %v174
    %s176 = vtos %v175
    %s177 = scvt.f32.s32.to.zero.pseudo %s176
    %p178 = scmp.eq.s32.totalorder 0, 0
    // Predicated region
    $region30: #{tpu_custom_call.1} parent=1 // pred_check
      %p179 = pneg %p178
    $region31: #{tpu_custom_call.1} parent=1 // pred_check_branch
      %181 = sbr.rel (%p179) target = $region33
    $region32: #{tpu_custom_call.1} parent=1 // pred_region
      %182 = vst [vmem:[#allocation2] sm:$0xff] 0.0
      %s183 = scalar_lea.smem [#allocation13], 0
      %184 = sst [smem:[%s183]] 0
    $region33: #{tpu_custom_call.1} parent=1 // pred_fallthru
      _
    %s185 = sld [smem:[#allocation13]]
    %s186 = sadd.s32 %s185, %s177
    %s187 = scalar_lea.smem [#allocation13], 0
    %188 = sst [smem:[%s187]] %s186
    %v189 = vld [vmem:[#allocation2] sm:$0xff]
    %v190 = vld [vmem:[#allocation9] sm:$0xff]
    %v191 = vld [vmem:[#allocation9 + $0x8] sm:$0xff]
    %v192 = vld [vmem:[#allocation9 + $0x10] sm:$0xff]
    %v193 = vld [vmem:[#allocation9 + $0x18] sm:$0xff]
    %v194 = vld [vmem:[#allocation9 + $0x20] sm:$0xff]
    %v195 = vld [vmem:[#allocation9 + $0x28] sm:$0xff]
    %v196 = vld [vmem:[#allocation9 + $0x30] sm:$0xff]
    %v197 = vld [vmem:[#allocation9 + $0x38] sm:$0xff]
    %v198 = vld [vmem:[#allocation9 + $0x40] sm:$0xff]
    %v199 = vld [vmem:[#allocation9 + $0x48] sm:$0xff]
    %v200 = vld [vmem:[#allocation9 + $0x50] sm:$0xff]
    %v201 = vld [vmem:[#allocation9 + $0x58] sm:$0xff]
    %v202 = vld [vmem:[#allocation9 + $0x60] sm:$0xff]
    %v203 = vld [vmem:[#allocation9 + $0x68] sm:$0xff]
    %v204 = vld [vmem:[#allocation9 + $0x70] sm:$0xff]
    %v205 = vld [vmem:[#allocation9 + $0x78] sm:$0xff]
    %206 = vmatprep.subr.mxu0 0.0
    %207 = vmatpush1.msra.mxu0 %v190
    %208 = vmatprep.subr.mxu0 0.0
    %209 = vmatpush1.msra.mxu0 %v191
    %210 = vmatprep.subr.mxu0 0.0
    %211 = vmatpush1.msra.mxu0 %v192
    %212 = vmatprep.subr.mxu0 0.0
    %213 = vmatpush1.msra.mxu0 %v193
    %214 = vmatprep.subr.mxu0 0.0
    %215 = vmatpush1.msra.mxu0 %v194
    %216 = vmatprep.subr.mxu0 0.0
    %217 = vmatpush1.msra.mxu0 %v195
    %218 = vmatprep.subr.mxu0 0.0
    %219 = vmatpush1.msra.mxu0 %v196
    %220 = vmatprep.subr.mxu0 0.0
    %221 = vmatpush1.msra.mxu0 %v197
    %222 = vmatprep.subr.mxu0 0.0
    %223 = vmatpush1.msra.mxu0 %v198
    %224 = vmatprep.subr.mxu0 0.0
    %225 = vmatpush1.msra.mxu0 %v199
    %226 = vmatprep.subr.mxu0 0.0
    %227 = vmatpush1.msra.mxu0 %v200
    %228 = vmatprep.subr.mxu0 0.0
    %229 = vmatpush1.msra.mxu0 %v201
    %230 = vmatprep.subr.mxu0 0.0
    %231 = vmatpush1.msra.mxu0 %v202
    %232 = vmatprep.subr.mxu0 0.0
    %233 = vmatpush1.msra.mxu0 %v203
    %234 = vmatprep.subr.mxu0 0.0
    %235 = vmatpush1.msra.mxu0 %v204
    %236 = vmatprep.subr.mxu0 0.0
    %237 = vmatpush1.msra.mxu0 %v205
    %238 = vmatprep.subr.mxu0 0.0
    %239 = vmatpush1.msra.mxu0 0.0
    %240 = vmatprep.subr.mxu0 0.0
    %241 = vmatpush1.msra.mxu0 0.0
    %242 = vmatprep.subr.mxu0 0.0
    %243 = vmatpush1.msra.mxu0 0.0
    %244 = vmatprep.subr.mxu0 0.0
    %245 = vmatpush1.msra.mxu0 0.0
    %246 = vmatprep.subr.mxu0 0.0
    %247 = vmatpush1.msra.mxu0 0.0
    %248 = vmatprep.subr.mxu0 0.0
    %249 = vmatpush1.msra.mxu0 0.0
    %250 = vmatprep.subr.mxu0 0.0
    %251 = vmatpush1.msra.mxu0 0.0
    %252 = vmatprep.subr.mxu0 0.0
    %253 = vmatpush1.msra.mxu0 0.0
    %254 = vmatprep.subr.mxu0 0.0
    %255 = vmatpush1.msra.mxu0 0.0
    %256 = vmatprep.subr.mxu0 0.0
    %257 = vmatpush1.msra.mxu0 0.0
    %258 = vmatprep.subr.mxu0 0.0
    %259 = vmatpush1.msra.mxu0 0.0
    %260 = vmatprep.subr.mxu0 0.0
    %261 = vmatpush1.msra.mxu0 0.0
    %262 = vmatprep.subr.mxu0 0.0
    %263 = vmatpush1.msra.mxu0 0.0
    %264 = vmatprep.subr.mxu0 0.0
    %265 = vmatpush1.msra.mxu0 0.0
    %266 = vmatprep.subr.mxu0 0.0
    %267 = vmatpush1.msra.mxu0 0.0
    %268 = vmatprep.subr.mxu0 0.0
    %269 = vmatpush1.msra.mxu0 0.0
    %270 = vmatprep.mubr.f32.mxu0 0.0
    %271 = vmatmul.mubr.f32.gmra.mrb[0].mxu0 %v156
    %v272 = vpop.f32.mrb[0].mxu0
    %v273 = vadd.f32 0.0, %v272
    %v274 = vpop.f32.mrb[0].mxu0
    %275 = vdwg.mxu0
    %v276 = vadd.f32 %v189, %v273
    %277 = vst [vmem:[#allocation2] sm:$0xff] %v276
    // Predicated region
    $region34: #{tpu_custom_call.1} parent=1 // pred_check
      %p278 = pneg %p178
    $region35: #{tpu_custom_call.1} parent=1 // pred_check_branch
      %280 = sbr.rel (%p278) target = $region37
    $region36: #{tpu_custom_call.1} parent=1 // pred_region
      %v281 = vld [vmem:[#allocation2] sm:$0xff]
      %282 = vst [vmem:[#allocation11] sm:$0xff] %v281
    $region37: #{tpu_custom_call.1} parent=1 // pred_fallthru
      _
    // Predicated region
    $region38: #{tpu_custom_call.1} parent=1 // pred_check
      _
    $region39: #{tpu_custom_call.1} parent=1 // pred_check_branch
      %284 = sbr.rel (0) target = $region41
    $region40: #{tpu_custom_call.1} parent=1 // pred_region
      %s286 = ssub.s32 128, 128
      %287 = vsyncadd [#allocation5], %s286
      %s289 = sshll.u32 [#allocation10], 4
      %s290 = int_to_ptr.vmem [resolvable:$true] %s289
      %292 = dma.vmem_to_hbm [thread:$0]  %s290, 128, %s4, [#allocation5]
    $region41: #{tpu_custom_call.1} parent=1 // pred_fallthru
      _
    // Predicated region
    $region42: #{tpu_custom_call.1} parent=1 // pred_check
      _
    $region43: #{tpu_custom_call.1} parent=1 // pred_check_branch
      %294 = sbr.rel (0) target = $region45
    $region44: #{tpu_custom_call.1} parent=1 // pred_region
      %s296 = ssub.s32 128, 128
      %297 = vsyncadd [#allocation12], %s296
      %s299 = sshll.u32 [#allocation11], 4
      %s300 = int_to_ptr.vmem [resolvable:$true] %s299
      %302 = dma.vmem_to_hbm [thread:$0]  %s300, 128, %s5, [#allocation12]
    $region45: #{tpu_custom_call.1} parent=1 // pred_fallthru
      _
    // Predicated region
    $region46: #{tpu_custom_call.1} parent=1 // pred_check
      _
    $region47: #{tpu_custom_call.1} parent=1 // pred_check_branch
      %304 = sbr.rel (0) target = $region49
    $region48: #{tpu_custom_call.1} parent=1 // pred_region
      %s306 = ssub.s32 16, 16
      %307 = vsyncadd [#allocation6], %s306
      %310 = dma.smem_to_hbm [#allocation13], 16, %s6, [#allocation6]
    $region49: #{tpu_custom_call.1} parent=1 // pred_fallthru
      _
    // Predicated region
    $region50: #{tpu_custom_call.1} parent=1 // pred_check
      _
    $region51: #{tpu_custom_call.1} parent=1 // pred_check_branch
      %312 = sbr.rel (0) target = $region53
    $region52: #{tpu_custom_call.1} parent=1 // pred_region
      %313 = dma.done [#allocation5], 128
    $region53: #{tpu_custom_call.1} parent=1 // pred_fallthru
      _
    // Predicated region
    $region54: #{tpu_custom_call.1} parent=1 // pred_check
      _
    $region55: #{tpu_custom_call.1} parent=1 // pred_check_branch
      %315 = sbr.rel (0) target = $region57
    $region56: #{tpu_custom_call.1} parent=1 // pred_region
      %316 = dma.done [#allocation12], 128
    $region57: #{tpu_custom_call.1} parent=1 // pred_fallthru
      _
    // Predicated region
    $region58: #{tpu_custom_call.1} parent=1 // pred_check
      _
    $region59: #{tpu_custom_call.1} parent=1 // pred_check_branch
      %318 = sbr.rel (0) target = $region61
    $region60: #{tpu_custom_call.1} parent=1 // pred_region
      %319 = dma.done [#allocation6], 16
    $region61: #{tpu_custom_call.1} parent=1 // pred_fallthru
      _
    %320 = sfence
    %321 = vsyncpa [#allocation4], 1
    %322 = vsyncpa [#allocation8], 1
    %323 = vsyncpa [#allocation5], 1
    %324 = vsyncpa [#allocation12], 1
    %325 = vsyncpa [#allocation6], 1

</llo_original>
